<compile_context>
chip_gen: v5e
topology: v5e:2x2
jax: 0.10.0
libtpu: 0.0.40
codegen_flags: <defaults>
</compile_context>

<pallas_src>
import functools

import jax
import jax.numpy as jnp
from jax.experimental import pallas as pl
from jax.experimental.pallas import tpu as pltpu

BN_EPS = 1e-5
LANE = 128
SUBLANE = 8
MAX_TM = 1024


def _round_up(x, m):
    return (x + m - 1) // m * m


# ---------------------------------------------------------------------------
# Kernels
# ---------------------------------------------------------------------------
def pnn_fc2_kernel_merged(x_ref, w1_ref, b1_ref, w2_ref, b2_ref,
                          w3_ref, b3_ref, out_ref):
    """v6e/v7x path: 3 MXU ops total.

    fc1 of both columns merged (K, 2H); fc2 of both columns as one
    block-diagonal (2H, 2H) matmul producing [feat | g2] directly; lateral
    adapter + both output heads folded into one (2H, OUT_pad) matmul.
    """
    cdt = w1_ref.dtype
    x = x_ref[...]
    if x.dtype != cdt:
        x = x.astype(cdt)

    h1 = jnp.dot(x, w1_ref[...], preferred_element_type=jnp.float32)
    h1 = jnp.maximum(h1 + b1_ref[...], 0.0)                  # (TM, 2Hp)

    h2 = jnp.dot(h1.astype(cdt), w2_ref[...],
                 preferred_element_type=jnp.float32)
    h2 = jnp.maximum(h2 + b2_ref[...], 0.0)                  # (TM, 2Hp) = [feat|g2]

    out_ref[...] = (
        jnp.dot(h2.astype(cdt), w3_ref[...],
                preferred_element_type=jnp.float32)
        + b3_ref[...])


def pnn_fc2_kernel_split(x_ref, w1_ref, b1_ref, bw2_ref, bb2_ref,
                         nw2_ref, nb2_ref, w3t_ref, w3b_ref, b3_ref, out_ref):
    """v5e/v5p path: keep the two 128-wide fc2 matmuls (native on 4x128x128
    MXUs). Still no concat: the output head is accumulated from two dots."""
    cdt = w1_ref.dtype
    x = x_ref[...]
    if x.dtype != cdt:
        x = x.astype(cdt)
    hp = bw2_ref.shape[0]

    h1 = jnp.dot(x, w1_ref[...], preferred_element_type=jnp.float32)
    h1 = jnp.maximum(h1 + b1_ref[...], 0.0)                  # (TM, 2Hp)

    feat = jnp.dot(h1[:, :hp].astype(cdt), bw2_ref[...],
                   preferred_element_type=jnp.float32)
    feat = jnp.maximum(feat + bb2_ref[...], 0.0)             # (TM, Hp)

    g = jnp.dot(h1[:, hp:].astype(cdt), nw2_ref[...],
                preferred_element_type=jnp.float32)
    g = jnp.maximum(g + nb2_ref[...], 0.0)                   # (TM, Hp)

    out_ref[...] = (
        jnp.dot(feat.astype(cdt), w3t_ref[...],
                preferred_element_type=jnp.float32)
        + jnp.dot(g.astype(cdt), w3b_ref[...],
                  preferred_element_type=jnp.float32)
        + b3_ref[...])


# ---------------------------------------------------------------------------
# Weight preparation: BN folding, lateral fold, hidden/lane padding, merging.
# ---------------------------------------------------------------------------
def _fold_bn(w, b, bn):
    # bn rows: [gamma; beta; running_mean; running_var], each (H,)
    gamma, beta, mean, var = bn[0], bn[1], bn[2], bn[3]
    scale = gamma * jax.lax.rsqrt(var + BN_EPS)
    w_f = w * scale[None, :]
    b_f = (b - mean) * scale + beta
    return w_f, b_f


def _prepare_weights(params, matmul_dtype, merge_fc2):
    bw1, bb1 = _fold_bn(params["b_fc1_w"], params["b_fc1_b"], params["b_bn1"])
    nw1, nb1 = _fold_bn(params["n_fc1_w"], params["n_fc1_b"], params["n_bn1"])
    bw2, bb2 = _fold_bn(params["b_fc2_w"], params["b_fc2_b"], params["b_bn2"])
    nw2, nb2 = _fold_bn(params["n_fc2_w"], params["n_fc2_b"], params["n_bn2"])

    H = bw1.shape[1]
    Hp = _round_up(H, LANE)

    def pad_c(a):  # pad last dim H -> Hp (zero pad; exact)
        return jnp.pad(a, ((0, 0), (0, Hp - H))) if Hp != H else a

    def pad_r(a):  # pad first dim H -> Hp
        return jnp.pad(a, ((0, Hp - H), (0, 0))) if Hp != H else a

    bw1, nw1 = pad_c(bw1), pad_c(nw1)
    bb1, nb1 = pad_c(bb1), pad_c(nb1)
    bw2, nw2 = pad_c(pad_r(bw2)), pad_c(pad_r(nw2))
    bb2, nb2 = pad_c(bb2), pad_c(nb2)

    # merged fc1: x @ [bw1 | nw1] computes both columns at once.
    w1 = jnp.concatenate([bw1, nw1], axis=1)                 # (K, 2Hp)
    b1 = jnp.concatenate([bb1, nb1], axis=1)                 # (1, 2Hp)

    bw3, bb3 = params["b_fc3_w"], params["b_fc3_b"]
    nw3, nb3 = params["n_fc3_w"], params["n_fc3_b"]
    nlw, nlb = params["n_lat_w"], params["n_lat_b"]

    base_out = bw3.shape[1]
    new_out = nw3.shape[1]
    total_out = base_out + new_out
    out_pad = _round_up(total_out, LANE)

    # Fold the lateral adapter into the new-column output head:
    #   new_logits = (g2 + feat@nlw + nlb) @ nw3 + nb3
    #              = g2 @ nw3 + feat @ (nlw@nw3) + (nlb@nw3 + nb3)
    nlw3 = nlw @ nw3                                         # (H, new_out)
    nb3_eff = nb3 + nlb @ nw3                                # (1, new_out)

    # Output head, lane-padded to 128:
    #   [feat | g2] @ [[bw3, nlw3], [0, nw3]] = [base_logits | new_logits]
    w3_top = jnp.zeros((Hp, out_pad), jnp.float32)
    w3_top = w3_top.at[:H, :base_out].set(bw3)
    w3_top = w3_top.at[:H, base_out:total_out].set(nlw3)
    w3_bot = jnp.zeros((Hp, out_pad), jnp.float32)
    w3_bot = w3_bot.at[:H, base_out:total_out].set(nw3)
    b3 = jnp.zeros((1, out_pad), jnp.float32)
    b3 = b3.at[:, :base_out].set(bb3[0])
    b3 = b3.at[:, base_out:total_out].set(nb3_eff[0])

    cast = lambda w: w.astype(matmul_dtype)

    if merge_fc2:
        # block-diagonal fc2 of both columns: one (2Hp, 2Hp) MXU op.
        w2 = jnp.zeros((2 * Hp, 2 * Hp), jnp.float32)
        w2 = w2.at[:Hp, :Hp].set(bw2)
        w2 = w2.at[Hp:, Hp:].set(nw2)
        b2 = jnp.concatenate([bb2, nb2], axis=1)             # (1, 2Hp)
        w3 = jnp.concatenate([w3_top, w3_bot], axis=0)       # (2Hp, out_pad)
        weights = (cast(w1), b1, cast(w2), b2, cast(w3), b3)
    else:
        weights = (cast(w1), b1, cast(bw2), bb2, cast(nw2), nb2,
                   cast(w3_top), cast(w3_bot), b3)
    return weights, Hp, out_pad, total_out


# ---------------------------------------------------------------------------
# Wrapper
# ---------------------------------------------------------------------------
def _pick_tm(b_pad):
    """Row tile: <= 1024 rows, >= 2 grid steps when the batch allows (v7x has
    two TensorCores), and <= ~15% batch-padding overhead (mem-bound kernel)."""
    if b_pad <= 2 * SUBLANE:
        return b_pad
    tm = min(MAX_TM, _round_up(-(-b_pad // 2), SUBLANE))
    while tm > SUBLANE:
        pad = _round_up(b_pad, tm) - b_pad
        if pad * 100 <= 15 * b_pad:
            return tm
        tm -= SUBLANE
    return SUBLANE


def _default_merge_fc2():
    # v5e/v5p MXUs are 128-wide: two separate 128x128 fc2 matmuls are already
    # native there; the block-diag merge only doubles real MXU flops.
    try:
        kind = jax.devices()[0].device_kind.lower()
    except Exception:
        return True
    return "v5" not in kind


@functools.partial(jax.jit, static_argnames=("matmul_dtype", "merge_fc2"))
def pnn_fc2_forward(x, params, matmul_dtype=jnp.bfloat16, merge_fc2=None):
    """Full PNN forward: returns concat([base_logits, new_logits], axis=-1)."""
    if merge_fc2 is None:
        merge_fc2 = _default_merge_fc2()

    B, K = x.shape
    weights, Hp, out_pad, total_out = _prepare_weights(
        params, matmul_dtype, merge_fc2)

    # Batch tiling only. No K padding of x: block (TM, K) is legal because K
    # equals the full array dim, so we avoid an extra pad pass over x.
    B8 = _round_up(B, SUBLANE)
    TM = _pick_tm(B8)
    B_pad = _round_up(B8, TM)

    x_in = x if x.dtype == matmul_dtype else x.astype(matmul_dtype)
    if B_pad != B:
        x_in = jnp.pad(x_in, ((0, B_pad - B), (0, 0)))
    grid = (B_pad // TM,)

    def const_spec(shape):
        return pl.BlockSpec(shape, lambda i, _n=len(shape): (0,) * _n)

    in_specs = [pl.BlockSpec((TM, K), lambda i: (i, 0))] + [
        const_spec(w.shape) for w in weights]
    out_specs = pl.BlockSpec((TM, out_pad), lambda i: (i, 0))

    kernel = pnn_fc2_kernel_merged if merge_fc2 else pnn_fc2_kernel_split

    if merge_fc2:
        mm = K * 2 * Hp + (2 * Hp) * (2 * Hp) + 2 * Hp * out_pad
    else:
        mm = K * 2 * Hp + 2 * Hp * Hp + 2 * Hp * out_pad
    flops = 2 * B_pad * mm
    bytes_accessed = (
        x_in.dtype.itemsize * B_pad * K
        + 4 * B_pad * out_pad
        + sum(int(w.size) * w.dtype.itemsize for w in weights)
    )

    out = pl.pallas_call(
        kernel,
        out_shape=jax.ShapeDtypeStruct((B_pad, out_pad), jnp.float32),
        grid=grid,
        in_specs=in_specs,
        out_specs=out_specs,
        compiler_params=pltpu.CompilerParams(
            dimension_semantics=("parallel",)),
        cost_estimate=pl.CostEstimate(
            flops=flops, transcendentals=0, bytes_accessed=bytes_accessed),
    )(x_in, *weights)

    return out[:B, :total_out]


# ---------------------------------------------------------------------------
# Deterministic parameter initialization (xavier_uniform weights, zero biases,
# BatchNorm1d defaults: gamma=1, beta=0, running_mean=0, running_var=1).
# ---------------------------------------------------------------------------
def _xavier_uniform(key, fan_in, fan_out):
    limit = (6.0 / (fan_in + fan_out)) ** 0.5
    # stored transposed: (in_features, out_features)
    return jax.random.uniform(
        key, (fan_in, fan_out), minval=-limit, maxval=limit, dtype=jnp.float32)


def _bn_params(h):
    return jnp.stack(
        [
            jnp.ones((h,), jnp.float32),   # gamma
            jnp.zeros((h,), jnp.float32),  # beta
            jnp.zeros((h,), jnp.float32),  # running_mean
            jnp.ones((h,), jnp.float32),   # running_var
        ],
        axis=0,
    )


def make_params(key, input_size, hidden_size, base_output_size, new_output_size):
    ks = jax.random.split(key, 8)
    z = lambda n: jnp.zeros((1, n), jnp.float32)
    return {
        # frozen base model (HAR_MLP_v2)
        "b_fc1_w": _xavier_uniform(ks[0], input_size, hidden_size),
        "b_fc1_b": z(hidden_size),
        "b_bn1": _bn_params(hidden_size),
        "b_fc2_w": _xavier_uniform(ks[1], hidden_size, hidden_size),
        "b_fc2_b": z(hidden_size),
        "b_bn2": _bn_params(hidden_size),
        "b_fc3_w": _xavier_uniform(ks[2], hidden_size, base_output_size),
        "b_fc3_b": z(base_output_size),
        # new column (HAR_PNN_Column_fc2)
        "n_fc1_w": _xavier_uniform(ks[3], input_size, hidden_size),
        "n_fc1_b": z(hidden_size),
        "n_bn1": _bn_params(hidden_size),
        "n_fc2_w": _xavier_uniform(ks[4], hidden_size, hidden_size),
        "n_fc2_b": z(hidden_size),
        "n_bn2": _bn_params(hidden_size),
        "n_lat_w": _xavier_uniform(ks[5], hidden_size, hidden_size),
        "n_lat_b": z(hidden_size),
        "n_fc3_w": _xavier_uniform(ks[6], hidden_size, new_output_size),
        "n_fc3_b": z(new_output_size),
    }


def reference_forward(x, p):
    """Pure-JAX reference mirroring the PyTorch eval-mode forward."""
    def bn(h, bnp):
        g, b, m, v = bnp[0], bnp[1], bnp[2], bnp[3]
        return (h - m) * (g / jnp.sqrt(v + BN_EPS)) + b

    h = jnp.maximum(bn(x @ p["b_fc1_w"] + p["b_fc1_b"], p["b_bn1"]), 0.0)
    feat = jnp.maximum(bn(h @ p["b_fc2_w"] + p["b_fc2_b"], p["b_bn2"]), 0.0)
    base_logits = feat @ p["b_fc3_w"] + p["b_fc3_b"]

    g = jnp.maximum(bn(x @ p["n_fc1_w"] + p["n_fc1_b"], p["n_bn1"]), 0.0)
    g = jnp.maximum(bn(g @ p["n_fc2_w"] + p["n_fc2_b"], p["n_bn2"]), 0.0)
    g = g + feat @ p["n_lat_w"] + p["n_lat_b"]
    new_logits = g @ p["n_fc3_w"] + p["n_fc3_b"]
    return jnp.concatenate([base_logits, new_logits], axis=-1)


if __name__ == "__main__":
    B = 8
    INPUT_SIZE = 64      # stand-in for HAR's 561 features (small test shape)
    HIDDEN_SIZE = 128
    BASE_OUTPUT = 2      # base_model output_size
    NEW_OUTPUT = 1       # new_column new_output_size

    key = jax.random.PRNGKey(0)
    k_x, k_p = jax.random.split(key)
    x = jax.random.normal(k_x, (B, INPUT_SIZE), dtype=jnp.float32)
    params = make_params(k_p, INPUT_SIZE, HIDDEN_SIZE, BASE_OUTPUT, NEW_OUTPUT)

    ref = reference_forward(x, params)

    # f32 operands, merged block-diagonal fc2 (v6e/v7x layout): tight tolerance.
    out_m = jax.block_until_ready(
        pnn_fc2_forward(x, params, matmul_dtype=jnp.float32, merge_fc2=True))
    assert out_m.shape == (B, BASE_OUTPUT + NEW_OUTPUT), out_m.shape
    assert jnp.allclose(out_m, ref, atol=1e-4, rtol=1e-4), "f32 merged mismatch"

    # f32 operands, split fc2 (v5e layout): tight tolerance.
    out_s = jax.block_until_ready(
        pnn_fc2_forward(x, params, matmul_dtype=jnp.float32, merge_fc2=False))
    assert jnp.allclose(out_s, ref, atol=1e-4, rtol=1e-4), "f32 split mismatch"

    # default path: bf16 matmul operands + generation-appropriate fc2 layout.
    out_def = jax.block_until_ready(pnn_fc2_forward(x, params))
    assert out_def.shape == (B, BASE_OUTPUT + NEW_OUTPUT), out_def.shape
    assert jnp.allclose(out_def, ref, atol=1e-1, rtol=5e-2), "bf16 mismatch"

    print("KERNEL_OK")
</pallas_src>

<mosaic_0001>
module attributes {stable_mosaic.version = 11 : i64} {
  func.func @pnn_fc2_kernel_merged(%arg0: i32, %arg1: memref<8x64xf32, #tpu.memory_space<vmem>>, %arg2: memref<64x256xf32, #tpu.memory_space<vmem>>, %arg3: memref<1x256xf32, #tpu.memory_space<vmem>>, %arg4: memref<256x256xf32, #tpu.memory_space<vmem>>, %arg5: memref<1x256xf32, #tpu.memory_space<vmem>>, %arg6: memref<256x128xf32, #tpu.memory_space<vmem>>, %arg7: memref<1x128xf32, #tpu.memory_space<vmem>>, %arg8: memref<8x128xf32, #tpu.memory_space<vmem>>) attributes {dimension_semantics = [#tpu.dimension_semantics<parallel>], iteration_bounds = array<i64: 1>, scalar_prefetch = 0 : i64, scratch_operands = 0 : i64, tpu.core_type = #tpu.core_type<tc>, window_params = [{transform_indices = @transform_0, window_bounds = array<i64: 8, 64>}, {pipeline_mode = #tpu.pipeline_mode<synchronous>, transform_indices = @transform_1, window_bounds = array<i64: 64, 256>}, {pipeline_mode = #tpu.pipeline_mode<synchronous>, transform_indices = @transform_2, window_bounds = array<i64: 1, 256>}, {pipeline_mode = #tpu.pipeline_mode<synchronous>, transform_indices = @transform_3, window_bounds = array<i64: 256, 256>}, {pipeline_mode = #tpu.pipeline_mode<synchronous>, transform_indices = @transform_4, window_bounds = array<i64: 1, 256>}, {pipeline_mode = #tpu.pipeline_mode<synchronous>, transform_indices = @transform_5, window_bounds = array<i64: 256, 128>}, {pipeline_mode = #tpu.pipeline_mode<synchronous>, transform_indices = @transform_6, window_bounds = array<i64: 1, 128>}, {transform_indices = @transform_7, window_bounds = array<i64: 8, 128>}]} {
    %c0 = arith.constant 0 : index
    %c0_0 = arith.constant 0 : index
    %0 = vector.load %arg1[%c0, %c0_0] : memref<8x64xf32, #tpu.memory_space<vmem>>, vector<8x64xf32>
    %c0_1 = arith.constant 0 : index
    %c0_2 = arith.constant 0 : index
    %1 = vector.load %arg2[%c0_1, %c0_2] : memref<64x256xf32, #tpu.memory_space<vmem>>, vector<64x256xf32>
    %cst = arith.constant dense<0.000000e+00> : vector<8x256xf32>
    %2 = tpu.matmul %0, %1, %cst {dimension_numbers = #tpu.dot_dimension_numbers<[1], [0], [0], [1], [0, 0, 1, 1], [], []>} : vector<8x64xf32>, vector<64x256xf32>, vector<8x256xf32> -> vector<8x256xf32>
    %c0_3 = arith.constant 0 : index
    %c0_4 = arith.constant 0 : index
    %3 = vector.load %arg3[%c0_3, %c0_4] : memref<1x256xf32, #tpu.memory_space<vmem>>, vector<1x256xf32>
    %4 = vector.broadcast %3 : vector<1x256xf32> to vector<8x256xf32>
    %5 = arith.addf %2, %4 : vector<8x256xf32>
    %cst_5 = arith.constant 0.000000e+00 : f32
    %6 = vector.broadcast %cst_5 : f32 to vector<8x256xf32>
    %7 = arith.maximumf %5, %6 : vector<8x256xf32>
    %c0_6 = arith.constant 0 : index
    %c0_7 = arith.constant 0 : index
    %8 = vector.load %arg4[%c0_6, %c0_7] : memref<256x256xf32, #tpu.memory_space<vmem>>, vector<256x256xf32>
    %cst_8 = arith.constant dense<0.000000e+00> : vector<8x256xf32>
    %9 = tpu.matmul %7, %8, %cst_8 {dimension_numbers = #tpu.dot_dimension_numbers<[1], [0], [0], [1], [0, 0, 1, 1], [], []>} : vector<8x256xf32>, vector<256x256xf32>, vector<8x256xf32> -> vector<8x256xf32>
    %c0_9 = arith.constant 0 : index
    %c0_10 = arith.constant 0 : index
    %10 = vector.load %arg5[%c0_9, %c0_10] : memref<1x256xf32, #tpu.memory_space<vmem>>, vector<1x256xf32>
    %11 = vector.broadcast %10 : vector<1x256xf32> to vector<8x256xf32>
    %12 = arith.addf %9, %11 : vector<8x256xf32>
    %cst_11 = arith.constant 0.000000e+00 : f32
    %13 = vector.broadcast %cst_11 : f32 to vector<8x256xf32>
    %14 = arith.maximumf %12, %13 : vector<8x256xf32>
    %c0_12 = arith.constant 0 : index
    %c0_13 = arith.constant 0 : index
    %15 = vector.load %arg6[%c0_12, %c0_13] : memref<256x128xf32, #tpu.memory_space<vmem>>, vector<256x128xf32>
    %cst_14 = arith.constant dense<0.000000e+00> : vector<8x128xf32>
    %16 = tpu.matmul %14, %15, %cst_14 {dimension_numbers = #tpu.dot_dimension_numbers<[1], [0], [0], [1], [0, 0, 1, 1], [], []>} : vector<8x256xf32>, vector<256x128xf32>, vector<8x128xf32> -> vector<8x128xf32>
    %c0_15 = arith.constant 0 : index
    %c0_16 = arith.constant 0 : index
    %17 = vector.load %arg7[%c0_15, %c0_16] : memref<1x128xf32, #tpu.memory_space<vmem>>, vector<1x128xf32>
    %18 = vector.broadcast %17 : vector<1x128xf32> to vector<8x128xf32>
    %19 = arith.addf %16, %18 : vector<8x128xf32>
    %c0_17 = arith.constant 0 : index
    %c0_18 = arith.constant 0 : index
    %20 = vector.load %arg8[%c0_17, %c0_18] : memref<8x128xf32, #tpu.memory_space<vmem>>, vector<8x128xf32>
    tpu.vector_store %arg8[%c0_17, %c0_18], %19 {strides = array<i32>} : memref<8x128xf32, #tpu.memory_space<vmem>>, vector<8x128xf32>,
    return
  }
  func.func @transform_0(%arg0: i32) -> (i32, i32) {
    %c0_i32 = arith.constant 0 : i32
    %c0_i32_0 = arith.constant 0 : i32
    return %arg0, %c0_i32 : i32, i32
  }
  func.func @transform_1(%arg0: i32) -> (i32, i32) {
    %c0_i32 = arith.constant 0 : i32
    %c0_i32_0 = arith.constant 0 : i32
    %c0_i32_1 = arith.constant 0 : i32
    return %c0_i32, %c0_i32_0 : i32, i32
  }
  func.func @transform_2(%arg0: i32) -> (i32, i32) {
    %c0_i32 = arith.constant 0 : i32
    %c0_i32_0 = arith.constant 0 : i32
    %c0_i32_1 = arith.constant 0 : i32
    return %c0_i32, %c0_i32_0 : i32, i32
  }
  func.func @transform_3(%arg0: i32) -> (i32, i32) {
    %c0_i32 = arith.constant 0 : i32
    %c0_i32_0 = arith.constant 0 : i32
    %c0_i32_1 = arith.constant 0 : i32
    return %c0_i32, %c0_i32_0 : i32, i32
  }
  func.func @transform_4(%arg0: i32) -> (i32, i32) {
    %c0_i32 = arith.constant 0 : i32
    %c0_i32_0 = arith.constant 0 : i32
    %c0_i32_1 = arith.constant 0 : i32
    return %c0_i32, %c0_i32_0 : i32, i32
  }
  func.func @transform_5(%arg0: i32) -> (i32, i32) {
    %c0_i32 = arith.constant 0 : i32
    %c0_i32_0 = arith.constant 0 : i32
    %c0_i32_1 = arith.constant 0 : i32
    return %c0_i32, %c0_i32_0 : i32, i32
  }
  func.func @transform_6(%arg0: i32) -> (i32, i32) {
    %c0_i32 = arith.constant 0 : i32
    %c0_i32_0 = arith.constant 0 : i32
    %c0_i32_1 = arith.constant 0 : i32
    return %c0_i32, %c0_i32_0 : i32, i32
  }
  func.func @transform_7(%arg0: i32) -> (i32, i32) {
    %c0_i32 = arith.constant 0 : i32
    %c0_i32_0 = arith.constant 0 : i32
    return %arg0, %c0_i32 : i32, i32
  }
}

</mosaic_0001>

<llo_original>
// kernel: pnn_fc2_forward.1
$region0: #{pnn_fc2_forward.1}
  #allocation0 [shape = 'u32[]', space=smem, size = 0x4, offset = 0x4, fixed_abs, tag = 'smem constant byte address 0x4 - core index']
  #allocation1 [shape = 'u32[72,128]{1,0:T(1,128)}', space=vmem, size = 0x9000, scoped, tag = 'internal scratch']
  %s0 = inlined_call_operand.vmem [shape: f32[8,64], index: 0, kind: input, shape index: {}]
  %s1 = inlined_call_operand.vmem [shape: f32[64,256], index: 1, kind: input, shape index: {}]
  %s2 = inlined_call_operand.vmem [shape: f32[1,256], index: 2, kind: input, shape index: {}]
  %s3 = inlined_call_operand.vmem [shape: f32[256,256], index: 3, kind: input, shape index: {}]
  %s4 = inlined_call_operand.vmem [shape: f32[1,256], index: 4, kind: input, shape index: {}]
  %s5 = inlined_call_operand.vmem [shape: f32[256,128], index: 5, kind: input, shape index: {}]
  %s6 = inlined_call_operand.vmem [shape: f32[1,128], index: 6, kind: input, shape index: {}]
  %s7 = inlined_call_operand.vmem [shape: f32[8,128], index: 7, kind: output, shape index: {}]
  %s8 = sld [smem:[#allocation0]]
  $region38: #{pnn_fc2_forward.1} parent=0
    _
  %s10 = ssub.s32 1, %s8
  %s11 = scalar_select 0, %s10, %s8
  // Predicated region
  $region2: #{pnn_fc2_forward.1} parent=0 // pred_check
    _
  $region3: #{pnn_fc2_forward.1} parent=0 // pred_check_branch
    %13 = sbr.rel (0) target = $region5
  $region4: #{pnn_fc2_forward.1} parent=0 // pred_region
    _
  $region5: #{pnn_fc2_forward.1} parent=0 // pred_fallthru
    _
  // Predicated region
  $region6: #{pnn_fc2_forward.1} parent=0 // pred_check
    _
  $region7: #{pnn_fc2_forward.1} parent=0 // pred_check_branch
    %15 = sbr.rel (0) target = $region9
  $region8: #{pnn_fc2_forward.1} parent=0 // pred_region
    _
  $region9: #{pnn_fc2_forward.1} parent=0 // pred_fallthru
    _
  // Predicated region
  $region10: #{pnn_fc2_forward.1} parent=0 // pred_check
    _
  $region11: #{pnn_fc2_forward.1} parent=0 // pred_check_branch
    %17 = sbr.rel (0) target = $region13
  $region12: #{pnn_fc2_forward.1} parent=0 // pred_region
    _
  $region13: #{pnn_fc2_forward.1} parent=0 // pred_fallthru
    _
  // Predicated region
  $region14: #{pnn_fc2_forward.1} parent=0 // pred_check
    _
  $region15: #{pnn_fc2_forward.1} parent=0 // pred_check_branch
    %19 = sbr.rel (0) target = $region17
  $region16: #{pnn_fc2_forward.1} parent=0 // pred_region
    _
  $region17: #{pnn_fc2_forward.1} parent=0 // pred_fallthru
    _
  // Predicated region
  $region18: #{pnn_fc2_forward.1} parent=0 // pred_check
    _
  $region19: #{pnn_fc2_forward.1} parent=0 // pred_check_branch
    %21 = sbr.rel (0) target = $region21
  $region20: #{pnn_fc2_forward.1} parent=0 // pred_region
    _
  $region21: #{pnn_fc2_forward.1} parent=0 // pred_fallthru
    _
  // Predicated region
  $region22: #{pnn_fc2_forward.1} parent=0 // pred_check
    _
  $region23: #{pnn_fc2_forward.1} parent=0 // pred_check_branch
    %23 = sbr.rel (0) target = $region25
  $region24: #{pnn_fc2_forward.1} parent=0 // pred_region
    _
  $region25: #{pnn_fc2_forward.1} parent=0 // pred_fallthru
    _
  // Predicated region
  $region26: #{pnn_fc2_forward.1} parent=0 // pred_check
    _
  $region27: #{pnn_fc2_forward.1} parent=0 // pred_check_branch
    %25 = sbr.rel (0) target = $region29
  $region28: #{pnn_fc2_forward.1} parent=0 // pred_region
    _
  $region29: #{pnn_fc2_forward.1} parent=0 // pred_fallthru
    _
  %v26 = vld [vmem:[%s0] sm:$0xff]
  %v27 = vld [vmem:[%s1] sm:$0xff]
  %v28 = vld [vmem:[%s1 + $0x8] sm:$0xff]
  %v29 = vld [vmem:[%s1 + $0x10] sm:$0xff]
  %v30 = vld [vmem:[%s1 + $0x18] sm:$0xff]
  %v31 = vld [vmem:[%s1 + $0x20] sm:$0xff]
  %v32 = vld [vmem:[%s1 + $0x28] sm:$0xff]
  %v33 = vld [vmem:[%s1 + $0x30] sm:$0xff]
  %v34 = vld [vmem:[%s1 + $0x38] sm:$0xff]
  %v35 = vld [vmem:[%s1 + $0x40] sm:$0xff]
  %v36 = vld [vmem:[%s1 + $0x48] sm:$0xff]
  %v37 = vld [vmem:[%s1 + $0x50] sm:$0xff]
  %v38 = vld [vmem:[%s1 + $0x58] sm:$0xff]
  %v39 = vld [vmem:[%s1 + $0x60] sm:$0xff]
  %v40 = vld [vmem:[%s1 + $0x68] sm:$0xff]
  %v41 = vld [vmem:[%s1 + $0x70] sm:$0xff]
  %v42 = vld [vmem:[%s1 + $0x78] sm:$0xff]
  %v43 = vld [vmem:[%s2] sm:$0x3]
  %v45 = vperm.slane %v43, 0
  %v46 = vperm.slane %v43, 1
  %vm49 = vcmask 523264
  %v51 = vsel %vm49, %v26, 0
  %53 = vmatpush.msra.mxu0 0.0
  %54 = vmatpush.msra.mxu0 0.0
  %55 = vmatpush.msra.mxu0 0.0
  %56 = vmatpush.msra.mxu0 0.0
  %57 = vmatpush.msra.mxu0 0.0
  %58 = vmatpush.msra.mxu0 0.0
  %59 = vmatpush.msra.mxu0 0.0
  %60 = vmatpush.msra.mxu0 0.0
  %61 = vmatpush.msra.mxu0 %v41
  %62 = vmatpush.msra.mxu0 %v39
  %63 = vmatpush.msra.mxu0 %v37
  %64 = vmatpush.msra.mxu0 %v35
  %65 = vmatpush.msra.mxu0 %v33
  %66 = vmatpush.msra.mxu0 %v31
  %67 = vmatpush.msra.mxu0 %v29
  %68 = vmatpush.msra.mxu0 %v27
  %69 = vmatmul.f32.gmra.mxu0 %v51
  %v70 = vpop.f32.mrf.mxu0
  %v71 = vadd.f32 %v45, %v70
  %72 = vdwg.mxu0
  %73 = vmatpush.msra.mxu0 0.0
  %74 = vmatpush.msra.mxu0 0.0
  %75 = vmatpush.msra.mxu0 0.0
  %76 = vmatpush.msra.mxu0 0.0
  %77 = vmatpush.msra.mxu0 0.0
  %78 = vmatpush.msra.mxu0 0.0
  %79 = vmatpush.msra.mxu0 0.0
  %80 = vmatpush.msra.mxu0 0.0
  %81 = vmatpush.msra.mxu0 %v42
  %82 = vmatpush.msra.mxu0 %v40
  %83 = vmatpush.msra.mxu0 %v38
  %84 = vmatpush.msra.mxu0 %v36
  %85 = vmatpush.msra.mxu0 %v34
  %86 = vmatpush.msra.mxu0 %v32
  %87 = vmatpush.msra.mxu0 %v30
  %88 = vmatpush.msra.mxu0 %v28
  %89 = vmatmul.f32.gmra.mxu0 %v51
  %v90 = vpop.f32.mrf.mxu0
  %v91 = vadd.f32 %v46, %v90
  %92 = vdwg.mxu0
  %v93 = vmax.f32 %v71, 0.0
  %v94 = vmax.f32 %v91, 0.0
  %v95 = vld [vmem:[%s3] sm:$0xff]
  %v96 = vld [vmem:[%s3 + $0x8] sm:$0xff]
  %v97 = vld [vmem:[%s3 + $0x10] sm:$0xff]
  %v98 = vld [vmem:[%s3 + $0x18] sm:$0xff]
  %v99 = vld [vmem:[%s3 + $0x20] sm:$0xff]
  %v100 = vld [vmem:[%s3 + $0x28] sm:$0xff]
  %v101 = vld [vmem:[%s3 + $0x30] sm:$0xff]
  %v102 = vld [vmem:[%s3 + $0x38] sm:$0xff]
  %v103 = vld [vmem:[%s3 + $0x40] sm:$0xff]
  %v104 = vld [vmem:[%s3 + $0x48] sm:$0xff]
  %v105 = vld [vmem:[%s3 + $0x50] sm:$0xff]
  %v106 = vld [vmem:[%s3 + $0x58] sm:$0xff]
  %v107 = vld [vmem:[%s3 + $0x60] sm:$0xff]
  %v108 = vld [vmem:[%s3 + $0x68] sm:$0xff]
  %v109 = vld [vmem:[%s3 + $0x70] sm:$0xff]
  %v110 = vld [vmem:[%s3 + $0x78] sm:$0xff]
  %v111 = vld [vmem:[%s3 + $0x80] sm:$0xff]
  %v112 = vld [vmem:[%s3 + $0x88] sm:$0xff]
  %v113 = vld [vmem:[%s3 + $0x90] sm:$0xff]
  %v114 = vld [vmem:[%s3 + $0x98] sm:$0xff]
  %v115 = vld [vmem:[%s3 + $0xa0] sm:$0xff]
  %v116 = vld [vmem:[%s3 + $0xa8] sm:$0xff]
  %v117 = vld [vmem:[%s3 + $0xb0] sm:$0xff]
  %v118 = vld [vmem:[%s3 + $0xb8] sm:$0xff]
  %v119 = vld [vmem:[%s3 + $0xc0] sm:$0xff]
  %v120 = vld [vmem:[%s3 + $0xc8] sm:$0xff]
  %v121 = vld [vmem:[%s3 + $0xd0] sm:$0xff]
  %v122 = vld [vmem:[%s3 + $0xd8] sm:$0xff]
  %v123 = vld [vmem:[%s3 + $0xe0] sm:$0xff]
  %v124 = vld [vmem:[%s3 + $0xe8] sm:$0xff]
  %v125 = vld [vmem:[%s3 + $0xf0] sm:$0xff]
  %v126 = vld [vmem:[%s3 + $0xf8] sm:$0xff]
  %v127 = vld [vmem:[%s3 + $0x100] sm:$0xff]
  %v128 = vld [vmem:[%s3 + $0x108] sm:$0xff]
  %v129 = vld [vmem:[%s3 + $0x110] sm:$0xff]
  %v130 = vld [vmem:[%s3 + $0x118] sm:$0xff]
  %v131 = vld [vmem:[%s3 + $0x120] sm:$0xff]
  %v132 = vld [vmem:[%s3 + $0x128] sm:$0xff]
  %v133 = vld [vmem:[%s3 + $0x130] sm:$0xff]
  %v134 = vld [vmem:[%s3 + $0x138] sm:$0xff]
  %v135 = vld [vmem:[%s3 + $0x140] sm:$0xff]
  %v136 = vld [vmem:[%s3 + $0x148] sm:$0xff]
  %v137 = vld [vmem:[%s3 + $0x150] sm:$0xff]
  %v138 = vld [vmem:[%s3 + $0x158] sm:$0xff]
  %v139 = vld [vmem:[%s3 + $0x160] sm:$0xff]
  %v140 = vld [vmem:[%s3 + $0x168] sm:$0xff]
  %v141 = vld [vmem:[%s3 + $0x170] sm:$0xff]
  %v142 = vld [vmem:[%s3 + $0x178] sm:$0xff]
  %v143 = vld [vmem:[%s3 + $0x180] sm:$0xff]
  %v144 = vld [vmem:[%s3 + $0x188] sm:$0xff]
  %v145 = vld [vmem:[%s3 + $0x190] sm:$0xff]
  %v146 = vld [vmem:[%s3 + $0x198] sm:$0xff]
  %v147 = vld [vmem:[%s3 + $0x1a0] sm:$0xff]
  %v148 = vld [vmem:[%s3 + $0x1a8] sm:$0xff]
  %v149 = vld [vmem:[%s3 + $0x1b0] sm:$0xff]
  %v150 = vld [vmem:[%s3 + $0x1b8] sm:$0xff]
  %v151 = vld [vmem:[%s3 + $0x1c0] sm:$0xff]
  %v152 = vld [vmem:[%s3 + $0x1c8] sm:$0xff]
  %v153 = vld [vmem:[%s3 + $0x1d0] sm:$0xff]
  %v154 = vld [vmem:[%s3 + $0x1d8] sm:$0xff]
  %v155 = vld [vmem:[%s3 + $0x1e0] sm:$0xff]
  %v156 = vld [vmem:[%s3 + $0x1e8] sm:$0xff]
  %v157 = vld [vmem:[%s3 + $0x1f0] sm:$0xff]
  %v158 = vld [vmem:[%s3 + $0x1f8] sm:$0xff]
  %v159 = vld [vmem:[%s4] sm:$0x3]
  %v161 = vperm.slane %v159, 0
  %v162 = vperm.slane %v159, 1
  %165 = vmatpush.msra.mxu0 %v125
  %166 = vmatpush.msra.mxu0 %v123
  %167 = vmatpush.msra.mxu0 %v121
  %168 = vmatpush.msra.mxu0 %v119
  %169 = vmatpush.msra.mxu0 %v117
  %170 = vmatpush.msra.mxu0 %v115
  %171 = vmatpush.msra.mxu0 %v113
  %172 = vmatpush.msra.mxu0 %v111
  %173 = vmatpush.msra.mxu0 %v109
  %174 = vmatpush.msra.mxu0 %v107
  %175 = vmatpush.msra.mxu0 %v105
  %176 = vmatpush.msra.mxu0 %v103
  %177 = vmatpush.msra.mxu0 %v101
  %178 = vmatpush.msra.mxu0 %v99
  %179 = vmatpush.msra.mxu0 %v97
  %180 = vmatpush.msra.mxu0 %v95
  %181 = vmatmul.f32.gmra.mxu0 %v93
  %v182 = vpop.f32.mrf.mxu0
  %v183 = vadd.f32 %v161, %v182
  %184 = vdwg.mxu0
  %185 = vmatpush.msra.mxu0 %v157
  %186 = vmatpush.msra.mxu0 %v155
  %187 = vmatpush.msra.mxu0 %v153
  %188 = vmatpush.msra.mxu0 %v151
  %189 = vmatpush.msra.mxu0 %v149
  %190 = vmatpush.msra.mxu0 %v147
  %191 = vmatpush.msra.mxu0 %v145
  %192 = vmatpush.msra.mxu0 %v143
  %193 = vmatpush.msra.mxu0 %v141
  %194 = vmatpush.msra.mxu0 %v139
  %195 = vmatpush.msra.mxu0 %v137
  %196 = vmatpush.msra.mxu0 %v135
  %197 = vmatpush.msra.mxu0 %v133
  %198 = vmatpush.msra.mxu0 %v131
  %199 = vmatpush.msra.mxu0 %v129
  %200 = vmatpush.msra.mxu0 %v127
  %201 = vmatmul.f32.gmra.mxu0 %v94
  %v202 = vpop.f32.mrf.mxu0
  %v203 = vadd.f32 %v183, %v202
  %204 = vdwg.mxu0
  %205 = vmatpush.msra.mxu0 %v126
  %206 = vmatpush.msra.mxu0 %v124
  %207 = vmatpush.msra.mxu0 %v122
  %208 = vmatpush.msra.mxu0 %v120
  %209 = vmatpush.msra.mxu0 %v118
  %210 = vmatpush.msra.mxu0 %v116
  %211 = vmatpush.msra.mxu0 %v114
  %212 = vmatpush.msra.mxu0 %v112
  %213 = vmatpush.msra.mxu0 %v110
  %214 = vmatpush.msra.mxu0 %v108
  %215 = vmatpush.msra.mxu0 %v106
  %216 = vmatpush.msra.mxu0 %v104
  %217 = vmatpush.msra.mxu0 %v102
  %218 = vmatpush.msra.mxu0 %v100
  %219 = vmatpush.msra.mxu0 %v98
  %220 = vmatpush.msra.mxu0 %v96
  %221 = vmatmul.f32.gmra.mxu0 %v93
  %v222 = vpop.f32.mrf.mxu0
  %v223 = vadd.f32 %v162, %v222
  %224 = vdwg.mxu0
  %225 = vmatpush.msra.mxu0 %v158
  %226 = vmatpush.msra.mxu0 %v156
  %227 = vmatpush.msra.mxu0 %v154
  %228 = vmatpush.msra.mxu0 %v152
  %229 = vmatpush.msra.mxu0 %v150
  %230 = vmatpush.msra.mxu0 %v148
  %231 = vmatpush.msra.mxu0 %v146
  %232 = vmatpush.msra.mxu0 %v144
  %233 = vmatpush.msra.mxu0 %v142
  %234 = vmatpush.msra.mxu0 %v140
  %235 = vmatpush.msra.mxu0 %v138
  %236 = vmatpush.msra.mxu0 %v136
  %237 = vmatpush.msra.mxu0 %v134
  %238 = vmatpush.msra.mxu0 %v132
  %239 = vmatpush.msra.mxu0 %v130
  %240 = vmatpush.msra.mxu0 %v128
  %241 = vmatmul.f32.gmra.mxu0 %v94
  %v242 = vpop.f32.mrf.mxu0
  %v243 = vadd.f32 %v223, %v242
  %244 = vdwg.mxu0
  %v245 = vmax.f32 %v203, 0.0
  %v246 = vmax.f32 %v243, 0.0
  %v247 = vld [vmem:[%s5] sm:$0xff]
  %v248 = vld [vmem:[%s5 + $0x8] sm:$0xff]
  %v249 = vld [vmem:[%s5 + $0x10] sm:$0xff]
  %v250 = vld [vmem:[%s5 + $0x18] sm:$0xff]
  %v251 = vld [vmem:[%s5 + $0x20] sm:$0xff]
  %v252 = vld [vmem:[%s5 + $0x28] sm:$0xff]
  %v253 = vld [vmem:[%s5 + $0x30] sm:$0xff]
  %v254 = vld [vmem:[%s5 + $0x38] sm:$0xff]
  %v255 = vld [vmem:[%s5 + $0x40] sm:$0xff]
  %v256 = vld [vmem:[%s5 + $0x48] sm:$0xff]
  %v257 = vld [vmem:[%s5 + $0x50] sm:$0xff]
  %v258 = vld [vmem:[%s5 + $0x58] sm:$0xff]
  %v259 = vld [vmem:[%s5 + $0x60] sm:$0xff]
  %v260 = vld [vmem:[%s5 + $0x68] sm:$0xff]
  %v261 = vld [vmem:[%s5 + $0x70] sm:$0xff]
  %v262 = vld [vmem:[%s5 + $0x78] sm:$0xff]
  %v263 = vld [vmem:[%s5 + $0x80] sm:$0xff]
  %v264 = vld [vmem:[%s5 + $0x88] sm:$0xff]
  %v265 = vld [vmem:[%s5 + $0x90] sm:$0xff]
  %v266 = vld [vmem:[%s5 + $0x98] sm:$0xff]
  %v267 = vld [vmem:[%s5 + $0xa0] sm:$0xff]
  %v268 = vld [vmem:[%s5 + $0xa8] sm:$0xff]
  %v269 = vld [vmem:[%s5 + $0xb0] sm:$0xff]
  %v270 = vld [vmem:[%s5 + $0xb8] sm:$0xff]
  %v271 = vld [vmem:[%s5 + $0xc0] sm:$0xff]
  %v272 = vld [vmem:[%s5 + $0xc8] sm:$0xff]
  %v273 = vld [vmem:[%s5 + $0xd0] sm:$0xff]
  %v274 = vld [vmem:[%s5 + $0xd8] sm:$0xff]
  %v275 = vld [vmem:[%s5 + $0xe0] sm:$0xff]
  %v276 = vld [vmem:[%s5 + $0xe8] sm:$0xff]
  %v277 = vld [vmem:[%s5 + $0xf0] sm:$0xff]
  %v278 = vld [vmem:[%s5 + $0xf8] sm:$0xff]
  %v279 = vld [vmem:[%s6] sm:$0x1]
  %v281 = vperm.slane %v279, 0
  %283 = vmatpush.msra.mxu0 %v262
  %284 = vmatpush.msra.mxu0 %v261
  %285 = vmatpush.msra.mxu0 %v260
  %286 = vmatpush.msra.mxu0 %v259
  %287 = vmatpush.msra.mxu0 %v258
  %288 = vmatpush.msra.mxu0 %v257
  %289 = vmatpush.msra.mxu0 %v256
  %290 = vmatpush.msra.mxu0 %v255
  %291 = vmatpush.msra.mxu0 %v254
  %292 = vmatpush.msra.mxu0 %v253
  %293 = vmatpush.msra.mxu0 %v252
  %294 = vmatpush.msra.mxu0 %v251
  %295 = vmatpush.msra.mxu0 %v250
  %296 = vmatpush.msra.mxu0 %v249
  %297 = vmatpush.msra.mxu0 %v248
  %298 = vmatpush.msra.mxu0 %v247
  %299 = vmatmul.f32.gmra.mxu0 %v245
  %v300 = vpop.f32.mrf.mxu0
  %v301 = vadd.f32 %v281, %v300
  %302 = vdwg.mxu0
  %303 = vmatpush.msra.mxu0 %v278
  %304 = vmatpush.msra.mxu0 %v277
  %305 = vmatpush.msra.mxu0 %v276
  %306 = vmatpush.msra.mxu0 %v275
  %307 = vmatpush.msra.mxu0 %v274
  %308 = vmatpush.msra.mxu0 %v273
  %309 = vmatpush.msra.mxu0 %v272
  %310 = vmatpush.msra.mxu0 %v271
  %311 = vmatpush.msra.mxu0 %v270
  %312 = vmatpush.msra.mxu0 %v269
  %313 = vmatpush.msra.mxu0 %v268
  %314 = vmatpush.msra.mxu0 %v267
  %315 = vmatpush.msra.mxu0 %v266
  %316 = vmatpush.msra.mxu0 %v265
  %317 = vmatpush.msra.mxu0 %v264
  %318 = vmatpush.msra.mxu0 %v263
  %319 = vmatmul.f32.gmra.mxu0 %v246
  %v320 = vpop.f32.mrf.mxu0
  %v321 = vadd.f32 %v301, %v320
  %322 = vdwg.mxu0
  %323 = vst [vmem:[%s7] sm:$0xff] %v321
  // Predicated region
  $region30: #{pnn_fc2_forward.1} parent=0 // pred_check
    _
  $region31: #{pnn_fc2_forward.1} parent=0 // pred_check_branch
    %325 = sbr.rel (0) target = $region33
  $region32: #{pnn_fc2_forward.1} parent=0 // pred_region
    _
  $region33: #{pnn_fc2_forward.1} parent=0 // pred_fallthru
    _
  // Predicated region
  $region34: #{pnn_fc2_forward.1} parent=0 // pred_check
    _
  $region35: #{pnn_fc2_forward.1} parent=0 // pred_check_branch
    %327 = sbr.rel (0) target = $region37
  $region36: #{pnn_fc2_forward.1} parent=0 // pred_region
    _
  $region37: #{pnn_fc2_forward.1} parent=0 // pred_fallthru
    _

</llo_original>
